<compile_context>
chip_gen: v5e
topology: v5e:2x2
jax: 0.10.0
libtpu: 0.0.40
codegen_flags: <defaults>
</compile_context>

<pallas_src>
import jax
import jax.numpy as jnp
from jax import lax
from jax.experimental import pallas as pl
from jax.experimental.pallas import tpu as pltpu

K = 7          # conv kernel size
PAD = 3        # padding on each side
EPS = 1e-5     # BatchNorm eps


def _basic_block_kernel(x_ref, w1_ref, b1_ref, w2_ref, b2_ref,
                        o_ref, pad_ref, rhs_ref):
    """One batch block (NB elements) per grid step.

    x_ref  : (NB, C, L)        unpadded input (also the residual), f32
    w1_ref : (C, K*C)          conv1 weight, BN1 scale folded in, im2col layout
    b1_ref : (C, 1)            folded BN1 bias, f32
    w2_ref : (C, K*C)          conv2 weight, BN2 scale folded in, im2col layout
    b2_ref : (C, 1)            folded BN2 bias, f32
    o_ref  : (NB, C, L)        output
    pad_ref: (NB, C, L+2*PAD)  VMEM scratch, padded (halo) slab
    rhs_ref: (NB, K*C, L)      VMEM scratch, batched im2col RHS
    """
    nb, c, l = o_ref.shape
    cdtype = rhs_ref.dtype
    unroll = min(nb, 8)

    # Halo columns must be zero.  Zero them unconditionally every grid step:
    # relying on a program_id()==0 init is wrong when the "parallel" grid axis
    # is sharded across TensorCores (v7x megacore) or reordered.
    pad_ref[:, :, 0:PAD] = jnp.zeros((nb, c, PAD), cdtype)
    pad_ref[:, :, PAD + l:PAD + l + PAD] = jnp.zeros((nb, c, PAD), cdtype)

    def build_rhs():
        # K batched, lane-dense copies (one per conv tap, covering all NB).
        for k in range(K):
            rhs_ref[:, k * c:(k + 1) * c, :] = pad_ref[:, :, k:k + l]

    # ---- stage 1: conv1 + bn1(bias) + relu (dropout p=0.2: identity, eval) --
    pad_ref[:, :, PAD:PAD + l] = x_ref[...].astype(cdtype)
    build_rhs()

    def conv1_body(n, carry):
        h = jnp.dot(w1_ref[...], rhs_ref[n],
                    preferred_element_type=jnp.float32)
        h = jnp.maximum(h + b1_ref[...], 0.0)
        pad_ref[n, :, PAD:PAD + l] = h.astype(cdtype)
        return carry

    lax.fori_loop(0, nb, conv1_body, 0, unroll=unroll)

    # ---- stage 2: conv2 + bn2(bias) + residual + relu ----------------------
    build_rhs()

    def conv2_body(n, carry):
        out = jnp.dot(w2_ref[...], rhs_ref[n],
                      preferred_element_type=jnp.float32)
        out = out + b2_ref[...] + x_ref[n].astype(jnp.float32)
        o_ref[n] = jnp.maximum(out, 0.0).astype(o_ref.dtype)
        return carry

    lax.fori_loop(0, nb, conv2_body, 0, unroll=unroll)


def _round_up(a, b):
    return (a + b - 1) // b * b


def _vmem_budget_bytes():
    """Returns (working-set budget for block picking, vmem_limit_bytes)."""
    cap = 128 * 1024 * 1024
    try:
        cap = int(pltpu.get_tpu_info().vmem_capacity_bytes)
    except Exception:
        pass
    if cap >= 96 * 1024 * 1024:                       # v5e / v6e: 128 MiB VMEM
        return 32 * 1024 * 1024, 64 * 1024 * 1024
    return 18 * 1024 * 1024, 40 * 1024 * 1024         # v7x: 64 MiB VMEM


def _pick_batch_block(N, C, L, compute_bytes, budget_bytes):
    """Largest divisor of N whose per-step VMEM footprint fits the budget."""
    sub = 8 * 4 // compute_bytes                      # sublane granule (f32:8, bf16:16)
    x_blk = 2 * 4 * _round_up(C, 8) * _round_up(L, 128)        # double-buffered
    o_blk = 2 * 4 * _round_up(C, 8) * _round_up(L, 128)        # double-buffered
    pad = compute_bytes * _round_up(C, sub) * _round_up(L + 2 * PAD, 128)
    rhs = compute_bytes * _round_up(K * C, sub) * _round_up(L, 128)
    per_elem = x_blk + o_blk + pad + rhs
    nb = max(1, min(N, budget_bytes // max(per_elem, 1)))
    while N % nb:
        nb -= 1
    return nb


@jax.jit
def basic_block_1d(x, w1, w2, g1, be1, m1, v1, g2, be2, m2, v2):
    """Eval-mode BasicBlock1d forward.  x: (N, C, L) f32; conv weights (C, C, K)."""
    N, C, L = x.shape

    # bf16 weights / im2col RHS when the channel count keeps the per-tap
    # sublane writes 16-aligned (true for the real model widths 64..512),
    # otherwise f32.  Accumulation, bias and residual stay f32 either way.
    cdtype = jnp.bfloat16 if C % 16 == 0 else jnp.float32

    # Fold BatchNorm (eval): scale into the conv weights, keep only the bias.
    s1 = g1 / jnp.sqrt(v1 + EPS)
    s2 = g2 / jnp.sqrt(v2 + EPS)
    b1 = (be1 - m1 * s1).reshape(C, 1).astype(jnp.float32)
    b2 = (be2 - m2 * s2).reshape(C, 1).astype(jnp.float32)

    # im2col weight layout: w2d[o, k*C + c] = s[o] * w[o, c, k]  ->  (C, K*C)
    w1s = (w1 * s1[:, None, None]).transpose(0, 2, 1).reshape(C, K * C).astype(cdtype)
    w2s = (w2 * s2[:, None, None]).transpose(0, 2, 1).reshape(C, K * C).astype(cdtype)

    budget, vmem_limit = _vmem_budget_bytes()
    NB = _pick_batch_block(N, C, L, jnp.dtype(cdtype).itemsize, budget)
    grid = (N // NB,)

    grid_spec = pltpu.PrefetchScalarGridSpec(
        num_scalar_prefetch=0,
        grid=grid,
        in_specs=[
            pl.BlockSpec((NB, C, L), lambda i: (i, 0, 0)),     # x (also residual)
            pl.BlockSpec((C, K * C), lambda i: (0, 0)),        # w1 (scaled, im2col)
            pl.BlockSpec((C, 1), lambda i: (0, 0)),            # b1
            pl.BlockSpec((C, K * C), lambda i: (0, 0)),        # w2 (scaled, im2col)
            pl.BlockSpec((C, 1), lambda i: (0, 0)),            # b2
        ],
        out_specs=pl.BlockSpec((NB, C, L), lambda i: (i, 0, 0)),
        scratch_shapes=[
            pltpu.VMEM((NB, C, L + 2 * PAD), cdtype),          # padded (halo) slab
            pltpu.VMEM((NB, K * C, L), cdtype),                # batched im2col RHS
        ],
    )

    flops = 4 * N * C * C * K * L                  # two convs, 2 flops per MAC
    bytes_accessed = 8 * N * C * L + 2 * (C * K * C + C) * 4

    return pl.pallas_call(
        _basic_block_kernel,
        out_shape=jax.ShapeDtypeStruct((N, C, L), x.dtype),
        grid_spec=grid_spec,
        compiler_params=pltpu.CompilerParams(
            dimension_semantics=("parallel",),
            vmem_limit_bytes=vmem_limit),
        cost_estimate=pl.CostEstimate(flops=flops, transcendentals=0,
                                      bytes_accessed=bytes_accessed),
    )(x, w1s, b1, w2s, b2)


def _reference(x, w1, w2, g1, be1, m1, v1, g2, be2, m2, v2):
    """Pure-JAX reference (mirrors PyTorch eval-mode forward)."""
    dn = ("NCH", "OIH", "NCH")
    out = lax.conv_general_dilated(x, w1, window_strides=(1,),
                                   padding=[(PAD, PAD)], dimension_numbers=dn)
    out = (out - m1[None, :, None]) / jnp.sqrt(v1 + EPS)[None, :, None] \
        * g1[None, :, None] + be1[None, :, None]
    out = jnp.maximum(out, 0.0)
    out = lax.conv_general_dilated(out, w2, window_strides=(1,),
                                   padding=[(PAD, PAD)], dimension_numbers=dn)
    out = (out - m2[None, :, None]) / jnp.sqrt(v2 + EPS)[None, :, None] \
        * g2[None, :, None] + be2[None, :, None]
    out = out + x
    return jnp.maximum(out, 0.0)


def _make_inputs(key, N, C, L):
    k = jax.random.split(key, 11)
    x = jax.random.normal(k[0], (N, C, L), dtype=jnp.float32)
    w1 = 0.1 * jax.random.normal(k[1], (C, C, K), dtype=jnp.float32)
    w2 = 0.1 * jax.random.normal(k[2], (C, C, K), dtype=jnp.float32)
    g1 = 1.0 + 0.1 * jax.random.normal(k[3], (C,), dtype=jnp.float32)
    be1 = 0.1 * jax.random.normal(k[4], (C,), dtype=jnp.float32)
    m1 = 0.1 * jax.random.normal(k[5], (C,), dtype=jnp.float32)
    v1 = 0.5 + jax.random.uniform(k[6], (C,), dtype=jnp.float32)
    g2 = 1.0 + 0.1 * jax.random.normal(k[7], (C,), dtype=jnp.float32)
    be2 = 0.1 * jax.random.normal(k[8], (C,), dtype=jnp.float32)
    m2 = 0.1 * jax.random.normal(k[9], (C,), dtype=jnp.float32)
    v2 = 0.5 + jax.random.uniform(k[10], (C,), dtype=jnp.float32)
    return (x, w1, w2, g1, be1, m1, v1, g2, be2, m2, v2)


if __name__ == "__main__":
    key = jax.random.PRNGKey(0)
    # (N, C, L), tolerance.  C=8 exercises the f32 path; C=16 exercises the
    # bf16 weight/RHS path (looser tolerance for bf16 rounding).
    cases = [((2, 8, 128), 1e-4), ((2, 16, 128), 5e-2)]
    for (N, C, L), tol in cases:
        args = _make_inputs(key, N, C, L)
        out = jax.block_until_ready(basic_block_1d(*args))
        ref = _reference(*args)
        assert out.shape == (N, C, L)
        assert jnp.allclose(out, ref, atol=tol, rtol=tol), \
            f"shape {(N, C, L)}: max err {jnp.max(jnp.abs(out - ref))}"
    print("KERNEL_OK")
</pallas_src>

<mosaic_0001>
module attributes {stable_mosaic.version = 11 : i64} {
  func.func @_basic_block_kernel(%arg0: i32, %arg1: memref<2x8x128xf32, #tpu.memory_space<vmem>>, %arg2: memref<8x56xf32, #tpu.memory_space<vmem>>, %arg3: memref<8x1xf32, #tpu.memory_space<vmem>>, %arg4: memref<8x56xf32, #tpu.memory_space<vmem>>, %arg5: memref<8x1xf32, #tpu.memory_space<vmem>>, %arg6: memref<2x8x128xf32, #tpu.memory_space<vmem>>, %arg7: memref<2x8x134xf32, #tpu.memory_space<vmem>>, %arg8: memref<2x56x128xf32, #tpu.memory_space<vmem>>) attributes {dimension_semantics = [#tpu.dimension_semantics<parallel>], iteration_bounds = array<i64: 1>, scalar_prefetch = 0 : i64, scratch_operands = 2 : i64, tpu.core_type = #tpu.core_type<tc>, window_params = [{transform_indices = @transform_0, window_bounds = array<i64: 2, 8, 128>}, {pipeline_mode = #tpu.pipeline_mode<synchronous>, transform_indices = @transform_1, window_bounds = array<i64: 8, 56>}, {pipeline_mode = #tpu.pipeline_mode<synchronous>, transform_indices = @transform_2, window_bounds = array<i64: 8, 1>}, {pipeline_mode = #tpu.pipeline_mode<synchronous>, transform_indices = @transform_3, window_bounds = array<i64: 8, 56>}, {pipeline_mode = #tpu.pipeline_mode<synchronous>, transform_indices = @transform_4, window_bounds = array<i64: 8, 1>}, {transform_indices = @transform_5, window_bounds = array<i64: 2, 8, 128>}]} {
    %cst = arith.constant 0.000000e+00 : f32
    %0 = vector.broadcast %cst : f32 to vector<2x8x3xf32>
    %c0 = arith.constant 0 : index
    %c0_0 = arith.constant 0 : index
    %c0_1 = arith.constant 0 : index
    %1 = vector.load %arg7[%c0, %c0_0, %c0_1] : memref<2x8x134xf32, #tpu.memory_space<vmem>>, vector<2x8x3xf32>
    tpu.vector_store %arg7[%c0, %c0_0, %c0_1], %0 {strides = array<i32>} : memref<2x8x134xf32, #tpu.memory_space<vmem>>, vector<2x8x3xf32>,
    %cst_2 = arith.constant 0.000000e+00 : f32
    %2 = vector.broadcast %cst_2 : f32 to vector<2x8x3xf32>
    %c0_3 = arith.constant 0 : index
    %c0_4 = arith.constant 0 : index
    %c131 = arith.constant 131 : index
    %3 = vector.load %arg7[%c0_3, %c0_4, %c131] : memref<2x8x134xf32, #tpu.memory_space<vmem>>, vector<2x8x3xf32>
    tpu.vector_store %arg7[%c0_3, %c0_4, %c131], %2 {strides = array<i32>} : memref<2x8x134xf32, #tpu.memory_space<vmem>>, vector<2x8x3xf32>,
    %c0_5 = arith.constant 0 : index
    %c0_6 = arith.constant 0 : index
    %c0_7 = arith.constant 0 : index
    %4 = vector.load %arg1[%c0_5, %c0_6, %c0_7] : memref<2x8x128xf32, #tpu.memory_space<vmem>>, vector<2x8x128xf32>
    %c0_8 = arith.constant 0 : index
    %c0_9 = arith.constant 0 : index
    %c3 = arith.constant 3 : index
    %5 = vector.load %arg7[%c0_8, %c0_9, %c3] : memref<2x8x134xf32, #tpu.memory_space<vmem>>, vector<2x8x128xf32>
    tpu.vector_store %arg7[%c0_8, %c0_9, %c3], %4 {strides = array<i32>} : memref<2x8x134xf32, #tpu.memory_space<vmem>>, vector<2x8x128xf32>,
    %c0_10 = arith.constant 0 : index
    %c0_11 = arith.constant 0 : index
    %c0_12 = arith.constant 0 : index
    %6 = vector.load %arg7[%c0_10, %c0_11, %c0_12] : memref<2x8x134xf32, #tpu.memory_space<vmem>>, vector<2x8x128xf32>
    %c0_13 = arith.constant 0 : index
    %c0_14 = arith.constant 0 : index
    %c0_15 = arith.constant 0 : index
    %7 = vector.load %arg8[%c0_13, %c0_14, %c0_15] : memref<2x56x128xf32, #tpu.memory_space<vmem>>, vector<2x8x128xf32>
    tpu.vector_store %arg8[%c0_13, %c0_14, %c0_15], %6 {strides = array<i32>} : memref<2x56x128xf32, #tpu.memory_space<vmem>>, vector<2x8x128xf32>,
    %c0_16 = arith.constant 0 : index
    %c0_17 = arith.constant 0 : index
    %c1 = arith.constant 1 : index
    %8 = vector.load %arg7[%c0_16, %c0_17, %c1] : memref<2x8x134xf32, #tpu.memory_space<vmem>>, vector<2x8x128xf32>
    %c0_18 = arith.constant 0 : index
    %c8 = arith.constant 8 : index
    %c0_19 = arith.constant 0 : index
    %9 = vector.load %arg8[%c0_18, %c8, %c0_19] : memref<2x56x128xf32, #tpu.memory_space<vmem>>, vector<2x8x128xf32>
    tpu.vector_store %arg8[%c0_18, %c8, %c0_19], %8 {strides = array<i32>} : memref<2x56x128xf32, #tpu.memory_space<vmem>>, vector<2x8x128xf32>,
    %c0_20 = arith.constant 0 : index
    %c0_21 = arith.constant 0 : index
    %c2 = arith.constant 2 : index
    %10 = vector.load %arg7[%c0_20, %c0_21, %c2] : memref<2x8x134xf32, #tpu.memory_space<vmem>>, vector<2x8x128xf32>
    %c0_22 = arith.constant 0 : index
    %c16 = arith.constant 16 : index
    %c0_23 = arith.constant 0 : index
    %11 = vector.load %arg8[%c0_22, %c16, %c0_23] : memref<2x56x128xf32, #tpu.memory_space<vmem>>, vector<2x8x128xf32>
    tpu.vector_store %arg8[%c0_22, %c16, %c0_23], %10 {strides = array<i32>} : memref<2x56x128xf32, #tpu.memory_space<vmem>>, vector<2x8x128xf32>,
    %c0_24 = arith.constant 0 : index
    %c0_25 = arith.constant 0 : index
    %c3_26 = arith.constant 3 : index
    %12 = vector.load %arg7[%c0_24, %c0_25, %c3_26] : memref<2x8x134xf32, #tpu.memory_space<vmem>>, vector<2x8x128xf32>
    %c0_27 = arith.constant 0 : index
    %c24 = arith.constant 24 : index
    %c0_28 = arith.constant 0 : index
    %13 = vector.load %arg8[%c0_27, %c24, %c0_28] : memref<2x56x128xf32, #tpu.memory_space<vmem>>, vector<2x8x128xf32>
    tpu.vector_store %arg8[%c0_27, %c24, %c0_28], %12 {strides = array<i32>} : memref<2x56x128xf32, #tpu.memory_space<vmem>>, vector<2x8x128xf32>,
    %c0_29 = arith.constant 0 : index
    %c0_30 = arith.constant 0 : index
    %c4 = arith.constant 4 : index
    %14 = vector.load %arg7[%c0_29, %c0_30, %c4] : memref<2x8x134xf32, #tpu.memory_space<vmem>>, vector<2x8x128xf32>
    %c0_31 = arith.constant 0 : index
    %c32 = arith.constant 32 : index
    %c0_32 = arith.constant 0 : index
    %15 = vector.load %arg8[%c0_31, %c32, %c0_32] : memref<2x56x128xf32, #tpu.memory_space<vmem>>, vector<2x8x128xf32>
    tpu.vector_store %arg8[%c0_31, %c32, %c0_32], %14 {strides = array<i32>} : memref<2x56x128xf32, #tpu.memory_space<vmem>>, vector<2x8x128xf32>,
    %c0_33 = arith.constant 0 : index
    %c0_34 = arith.constant 0 : index
    %c5 = arith.constant 5 : index
    %16 = vector.load %arg7[%c0_33, %c0_34, %c5] : memref<2x8x134xf32, #tpu.memory_space<vmem>>, vector<2x8x128xf32>
    %c0_35 = arith.constant 0 : index
    %c40 = arith.constant 40 : index
    %c0_36 = arith.constant 0 : index
    %17 = vector.load %arg8[%c0_35, %c40, %c0_36] : memref<2x56x128xf32, #tpu.memory_space<vmem>>, vector<2x8x128xf32>
    tpu.vector_store %arg8[%c0_35, %c40, %c0_36], %16 {strides = array<i32>} : memref<2x56x128xf32, #tpu.memory_space<vmem>>, vector<2x8x128xf32>,
    %c0_37 = arith.constant 0 : index
    %c0_38 = arith.constant 0 : index
    %c6 = arith.constant 6 : index
    %18 = vector.load %arg7[%c0_37, %c0_38, %c6] : memref<2x8x134xf32, #tpu.memory_space<vmem>>, vector<2x8x128xf32>
    %c0_39 = arith.constant 0 : index
    %c48 = arith.constant 48 : index
    %c0_40 = arith.constant 0 : index
    %19 = vector.load %arg8[%c0_39, %c48, %c0_40] : memref<2x56x128xf32, #tpu.memory_space<vmem>>, vector<2x8x128xf32>
    tpu.vector_store %arg8[%c0_39, %c48, %c0_40], %18 {strides = array<i32>} : memref<2x56x128xf32, #tpu.memory_space<vmem>>, vector<2x8x128xf32>,
    %c0_i32 = arith.constant 0 : i32
    %c0_41 = arith.constant 0 : index
    %c0_42 = arith.constant 0 : index
    %20 = vector.load %arg2[%c0_41, %c0_42] : memref<8x56xf32, #tpu.memory_space<vmem>>, vector<8x56xf32>
    %21 = arith.index_cast %c0_i32 : i32 to index
    %c0_43 = arith.constant 0 : index
    %c0_44 = arith.constant 0 : index
    %22 = vector.load %arg8[%21, %c0_43, %c0_44] : memref<2x56x128xf32, #tpu.memory_space<vmem>>, vector<1x56x128xf32>
    %23 = vector.shape_cast %22 : vector<1x56x128xf32> to vector<56x128xf32>
    %cst_45 = arith.constant dense<0.000000e+00> : vector<8x128xf32>
    %24 = tpu.matmul %20, %23, %cst_45 {dimension_numbers = #tpu.dot_dimension_numbers<[1], [0], [0], [1], [0, 0, 1, 1], [], []>} : vector<8x56xf32>, vector<56x128xf32>, vector<8x128xf32> -> vector<8x128xf32>
    %c0_46 = arith.constant 0 : index
    %c0_47 = arith.constant 0 : index
    %25 = vector.load %arg3[%c0_46, %c0_47] : memref<8x1xf32, #tpu.memory_space<vmem>>, vector<8x1xf32>
    %26 = vector.broadcast %25 : vector<8x1xf32> to vector<8x128xf32>
    %27 = arith.addf %24, %26 : vector<8x128xf32>
    %cst_48 = arith.constant 0.000000e+00 : f32
    %28 = vector.broadcast %cst_48 : f32 to vector<8x128xf32>
    %29 = arith.maximumf %27, %28 : vector<8x128xf32>
    %30 = arith.index_cast %c0_i32 : i32 to index
    %c0_49 = arith.constant 0 : index
    %c3_50 = arith.constant 3 : index
    %31 = vector.load %arg7[%30, %c0_49, %c3_50] : memref<2x8x134xf32, #tpu.memory_space<vmem>>, vector<1x8x128xf32>
    %32 = vector.shape_cast %31 : vector<1x8x128xf32> to vector<8x128xf32>
    %33 = vector.shape_cast %29 : vector<8x128xf32> to vector<1x8x128xf32>
    tpu.vector_store %arg7[%30, %c0_49, %c3_50], %33 {strides = array<i32>} : memref<2x8x134xf32, #tpu.memory_space<vmem>>, vector<1x8x128xf32>,
    %c1_i32 = arith.constant 1 : i32
    %c0_51 = arith.constant 0 : index
    %c0_52 = arith.constant 0 : index
    %34 = vector.load %arg2[%c0_51, %c0_52] : memref<8x56xf32, #tpu.memory_space<vmem>>, vector<8x56xf32>
    %35 = arith.index_cast %c1_i32 : i32 to index
    %c0_53 = arith.constant 0 : index
    %c0_54 = arith.constant 0 : index
    %36 = vector.load %arg8[%35, %c0_53, %c0_54] : memref<2x56x128xf32, #tpu.memory_space<vmem>>, vector<1x56x128xf32>
    %37 = vector.shape_cast %36 : vector<1x56x128xf32> to vector<56x128xf32>
    %cst_55 = arith.constant dense<0.000000e+00> : vector<8x128xf32>
    %38 = tpu.matmul %34, %37, %cst_55 {dimension_numbers = #tpu.dot_dimension_numbers<[1], [0], [0], [1], [0, 0, 1, 1], [], []>} : vector<8x56xf32>, vector<56x128xf32>, vector<8x128xf32> -> vector<8x128xf32>
    %c0_56 = arith.constant 0 : index
    %c0_57 = arith.constant 0 : index
    %39 = vector.load %arg3[%c0_56, %c0_57] : memref<8x1xf32, #tpu.memory_space<vmem>>, vector<8x1xf32>
    %40 = vector.broadcast %39 : vector<8x1xf32> to vector<8x128xf32>
    %41 = arith.addf %38, %40 : vector<8x128xf32>
    %cst_58 = arith.constant 0.000000e+00 : f32
    %42 = vector.broadcast %cst_58 : f32 to vector<8x128xf32>
    %43 = arith.maximumf %41, %42 : vector<8x128xf32>
    %44 = arith.index_cast %c1_i32 : i32 to index
    %c0_59 = arith.constant 0 : index
    %c3_60 = arith.constant 3 : index
    %45 = vector.load %arg7[%44, %c0_59, %c3_60] : memref<2x8x134xf32, #tpu.memory_space<vmem>>, vector<1x8x128xf32>
    %46 = vector.shape_cast %45 : vector<1x8x128xf32> to vector<8x128xf32>
    %47 = vector.shape_cast %43 : vector<8x128xf32> to vector<1x8x128xf32>
    tpu.vector_store %arg7[%44, %c0_59, %c3_60], %47 {strides = array<i32>} : memref<2x8x134xf32, #tpu.memory_space<vmem>>, vector<1x8x128xf32>,
    %c2_i32 = arith.constant 2 : i32
    %c0_61 = arith.constant 0 : index
    %c0_62 = arith.constant 0 : index
    %c0_63 = arith.constant 0 : index
    %48 = vector.load %arg7[%c0_61, %c0_62, %c0_63] : memref<2x8x134xf32, #tpu.memory_space<vmem>>, vector<2x8x128xf32>
    %c0_64 = arith.constant 0 : index
    %c0_65 = arith.constant 0 : index
    %c0_66 = arith.constant 0 : index
    %49 = vector.load %arg8[%c0_64, %c0_65, %c0_66] : memref<2x56x128xf32, #tpu.memory_space<vmem>>, vector<2x8x128xf32>
    tpu.vector_store %arg8[%c0_64, %c0_65, %c0_66], %48 {strides = array<i32>} : memref<2x56x128xf32, #tpu.memory_space<vmem>>, vector<2x8x128xf32>,
    %c0_67 = arith.constant 0 : index
    %c0_68 = arith.constant 0 : index
    %c1_69 = arith.constant 1 : index
    %50 = vector.load %arg7[%c0_67, %c0_68, %c1_69] : memref<2x8x134xf32, #tpu.memory_space<vmem>>, vector<2x8x128xf32>
    %c0_70 = arith.constant 0 : index
    %c8_71 = arith.constant 8 : index
    %c0_72 = arith.constant 0 : index
    %51 = vector.load %arg8[%c0_70, %c8_71, %c0_72] : memref<2x56x128xf32, #tpu.memory_space<vmem>>, vector<2x8x128xf32>
    tpu.vector_store %arg8[%c0_70, %c8_71, %c0_72], %50 {strides = array<i32>} : memref<2x56x128xf32, #tpu.memory_space<vmem>>, vector<2x8x128xf32>,
    %c0_73 = arith.constant 0 : index
    %c0_74 = arith.constant 0 : index
    %c2_75 = arith.constant 2 : index
    %52 = vector.load %arg7[%c0_73, %c0_74, %c2_75] : memref<2x8x134xf32, #tpu.memory_space<vmem>>, vector<2x8x128xf32>
    %c0_76 = arith.constant 0 : index
    %c16_77 = arith.constant 16 : index
    %c0_78 = arith.constant 0 : index
    %53 = vector.load %arg8[%c0_76, %c16_77, %c0_78] : memref<2x56x128xf32, #tpu.memory_space<vmem>>, vector<2x8x128xf32>
    tpu.vector_store %arg8[%c0_76, %c16_77, %c0_78], %52 {strides = array<i32>} : memref<2x56x128xf32, #tpu.memory_space<vmem>>, vector<2x8x128xf32>,
    %c0_79 = arith.constant 0 : index
    %c0_80 = arith.constant 0 : index
    %c3_81 = arith.constant 3 : index
    %54 = vector.load %arg7[%c0_79, %c0_80, %c3_81] : memref<2x8x134xf32, #tpu.memory_space<vmem>>, vector<2x8x128xf32>
    %c0_82 = arith.constant 0 : index
    %c24_83 = arith.constant 24 : index
    %c0_84 = arith.constant 0 : index
    %55 = vector.load %arg8[%c0_82, %c24_83, %c0_84] : memref<2x56x128xf32, #tpu.memory_space<vmem>>, vector<2x8x128xf32>
    tpu.vector_store %arg8[%c0_82, %c24_83, %c0_84], %54 {strides = array<i32>} : memref<2x56x128xf32, #tpu.memory_space<vmem>>, vector<2x8x128xf32>,
    %c0_85 = arith.constant 0 : index
    %c0_86 = arith.constant 0 : index
    %c4_87 = arith.constant 4 : index
    %56 = vector.load %arg7[%c0_85, %c0_86, %c4_87] : memref<2x8x134xf32, #tpu.memory_space<vmem>>, vector<2x8x128xf32>
    %c0_88 = arith.constant 0 : index
    %c32_89 = arith.constant 32 : index
    %c0_90 = arith.constant 0 : index
    %57 = vector.load %arg8[%c0_88, %c32_89, %c0_90] : memref<2x56x128xf32, #tpu.memory_space<vmem>>, vector<2x8x128xf32>
    tpu.vector_store %arg8[%c0_88, %c32_89, %c0_90], %56 {strides = array<i32>} : memref<2x56x128xf32, #tpu.memory_space<vmem>>, vector<2x8x128xf32>,
    %c0_91 = arith.constant 0 : index
    %c0_92 = arith.constant 0 : index
    %c5_93 = arith.constant 5 : index
    %58 = vector.load %arg7[%c0_91, %c0_92, %c5_93] : memref<2x8x134xf32, #tpu.memory_space<vmem>>, vector<2x8x128xf32>
    %c0_94 = arith.constant 0 : index
    %c40_95 = arith.constant 40 : index
    %c0_96 = arith.constant 0 : index
    %59 = vector.load %arg8[%c0_94, %c40_95, %c0_96] : memref<2x56x128xf32, #tpu.memory_space<vmem>>, vector<2x8x128xf32>
    tpu.vector_store %arg8[%c0_94, %c40_95, %c0_96], %58 {strides = array<i32>} : memref<2x56x128xf32, #tpu.memory_space<vmem>>, vector<2x8x128xf32>,
    %c0_97 = arith.constant 0 : index
    %c0_98 = arith.constant 0 : index
    %c6_99 = arith.constant 6 : index
    %60 = vector.load %arg7[%c0_97, %c0_98, %c6_99] : memref<2x8x134xf32, #tpu.memory_space<vmem>>, vector<2x8x128xf32>
    %c0_100 = arith.constant 0 : index
    %c48_101 = arith.constant 48 : index
    %c0_102 = arith.constant 0 : index
    %61 = vector.load %arg8[%c0_100, %c48_101, %c0_102] : memref<2x56x128xf32, #tpu.memory_space<vmem>>, vector<2x8x128xf32>
    tpu.vector_store %arg8[%c0_100, %c48_101, %c0_102], %60 {strides = array<i32>} : memref<2x56x128xf32, #tpu.memory_space<vmem>>, vector<2x8x128xf32>,
    %c0_i32_103 = arith.constant 0 : i32
    %c0_104 = arith.constant 0 : index
    %c0_105 = arith.constant 0 : index
    %62 = vector.load %arg4[%c0_104, %c0_105] : memref<8x56xf32, #tpu.memory_space<vmem>>, vector<8x56xf32>
    %63 = arith.index_cast %c0_i32_103 : i32 to index
    %c0_106 = arith.constant 0 : index
    %c0_107 = arith.constant 0 : index
    %64 = vector.load %arg8[%63, %c0_106, %c0_107] : memref<2x56x128xf32, #tpu.memory_space<vmem>>, vector<1x56x128xf32>
    %65 = vector.shape_cast %64 : vector<1x56x128xf32> to vector<56x128xf32>
    %cst_108 = arith.constant dense<0.000000e+00> : vector<8x128xf32>
    %66 = tpu.matmul %62, %65, %cst_108 {dimension_numbers = #tpu.dot_dimension_numbers<[1], [0], [0], [1], [0, 0, 1, 1], [], []>} : vector<8x56xf32>, vector<56x128xf32>, vector<8x128xf32> -> vector<8x128xf32>
    %c0_109 = arith.constant 0 : index
    %c0_110 = arith.constant 0 : index
    %67 = vector.load %arg5[%c0_109, %c0_110] : memref<8x1xf32, #tpu.memory_space<vmem>>, vector<8x1xf32>
    %68 = vector.broadcast %67 : vector<8x1xf32> to vector<8x128xf32>
    %69 = arith.addf %66, %68 : vector<8x128xf32>
    %70 = arith.index_cast %c0_i32_103 : i32 to index
    %c0_111 = arith.constant 0 : index
    %c0_112 = arith.constant 0 : index
    %71 = vector.load %arg1[%70, %c0_111, %c0_112] : memref<2x8x128xf32, #tpu.memory_space<vmem>>, vector<1x8x128xf32>
    %72 = vector.shape_cast %71 : vector<1x8x128xf32> to vector<8x128xf32>
    %73 = arith.addf %69, %72 : vector<8x128xf32>
    %cst_113 = arith.constant 0.000000e+00 : f32
    %74 = vector.broadcast %cst_113 : f32 to vector<8x128xf32>
    %75 = arith.maximumf %73, %74 : vector<8x128xf32>
    %76 = arith.index_cast %c0_i32_103 : i32 to index
    %c0_114 = arith.constant 0 : index
    %c0_115 = arith.constant 0 : index
    %77 = vector.load %arg6[%76, %c0_114, %c0_115] : memref<2x8x128xf32, #tpu.memory_space<vmem>>, vector<1x8x128xf32>
    %78 = vector.shape_cast %77 : vector<1x8x128xf32> to vector<8x128xf32>
    %79 = vector.shape_cast %75 : vector<8x128xf32> to vector<1x8x128xf32>
    tpu.vector_store %arg6[%76, %c0_114, %c0_115], %79 {strides = array<i32>} : memref<2x8x128xf32, #tpu.memory_space<vmem>>, vector<1x8x128xf32>,
    %c1_i32_116 = arith.constant 1 : i32
    %c0_117 = arith.constant 0 : index
    %c0_118 = arith.constant 0 : index
    %80 = vector.load %arg4[%c0_117, %c0_118] : memref<8x56xf32, #tpu.memory_space<vmem>>, vector<8x56xf32>
    %81 = arith.index_cast %c1_i32_116 : i32 to index
    %c0_119 = arith.constant 0 : index
    %c0_120 = arith.constant 0 : index
    %82 = vector.load %arg8[%81, %c0_119, %c0_120] : memref<2x56x128xf32, #tpu.memory_space<vmem>>, vector<1x56x128xf32>
    %83 = vector.shape_cast %82 : vector<1x56x128xf32> to vector<56x128xf32>
    %cst_121 = arith.constant dense<0.000000e+00> : vector<8x128xf32>
    %84 = tpu.matmul %80, %83, %cst_121 {dimension_numbers = #tpu.dot_dimension_numbers<[1], [0], [0], [1], [0, 0, 1, 1], [], []>} : vector<8x56xf32>, vector<56x128xf32>, vector<8x128xf32> -> vector<8x128xf32>
    %c0_122 = arith.constant 0 : index
    %c0_123 = arith.constant 0 : index
    %85 = vector.load %arg5[%c0_122, %c0_123] : memref<8x1xf32, #tpu.memory_space<vmem>>, vector<8x1xf32>
    %86 = vector.broadcast %85 : vector<8x1xf32> to vector<8x128xf32>
    %87 = arith.addf %84, %86 : vector<8x128xf32>
    %88 = arith.index_cast %c1_i32_116 : i32 to index
    %c0_124 = arith.constant 0 : index
    %c0_125 = arith.constant 0 : index
    %89 = vector.load %arg1[%88, %c0_124, %c0_125] : memref<2x8x128xf32, #tpu.memory_space<vmem>>, vector<1x8x128xf32>
    %90 = vector.shape_cast %89 : vector<1x8x128xf32> to vector<8x128xf32>
    %91 = arith.addf %87, %90 : vector<8x128xf32>
    %cst_126 = arith.constant 0.000000e+00 : f32
    %92 = vector.broadcast %cst_126 : f32 to vector<8x128xf32>
    %93 = arith.maximumf %91, %92 : vector<8x128xf32>
    %94 = arith.index_cast %c1_i32_116 : i32 to index
    %c0_127 = arith.constant 0 : index
    %c0_128 = arith.constant 0 : index
    %95 = vector.load %arg6[%94, %c0_127, %c0_128] : memref<2x8x128xf32, #tpu.memory_space<vmem>>, vector<1x8x128xf32>
    %96 = vector.shape_cast %95 : vector<1x8x128xf32> to vector<8x128xf32>
    %97 = vector.shape_cast %93 : vector<8x128xf32> to vector<1x8x128xf32>
    tpu.vector_store %arg6[%94, %c0_127, %c0_128], %97 {strides = array<i32>} : memref<2x8x128xf32, #tpu.memory_space<vmem>>, vector<1x8x128xf32>,
    %c2_i32_129 = arith.constant 2 : i32
    return
  }
  func.func @transform_0(%arg0: i32) -> (i32, i32, i32) {
    %c0_i32 = arith.constant 0 : i32
    %c0_i32_0 = arith.constant 0 : i32
    %c0_i32_1 = arith.constant 0 : i32
    return %arg0, %c0_i32, %c0_i32_0 : i32, i32, i32
  }
  func.func @transform_1(%arg0: i32) -> (i32, i32) {
    %c0_i32 = arith.constant 0 : i32
    %c0_i32_0 = arith.constant 0 : i32
    %c0_i32_1 = arith.constant 0 : i32
    return %c0_i32, %c0_i32_0 : i32, i32
  }
  func.func @transform_2(%arg0: i32) -> (i32, i32) {
    %c0_i32 = arith.constant 0 : i32
    %c0_i32_0 = arith.constant 0 : i32
    %c0_i32_1 = arith.constant 0 : i32
    return %c0_i32, %c0_i32_0 : i32, i32
  }
  func.func @transform_3(%arg0: i32) -> (i32, i32) {
    %c0_i32 = arith.constant 0 : i32
    %c0_i32_0 = arith.constant 0 : i32
    %c0_i32_1 = arith.constant 0 : i32
    return %c0_i32, %c0_i32_0 : i32, i32
  }
  func.func @transform_4(%arg0: i32) -> (i32, i32) {
    %c0_i32 = arith.constant 0 : i32
    %c0_i32_0 = arith.constant 0 : i32
    %c0_i32_1 = arith.constant 0 : i32
    return %c0_i32, %c0_i32_0 : i32, i32
  }
  func.func @transform_5(%arg0: i32) -> (i32, i32, i32) {
    %c0_i32 = arith.constant 0 : i32
    %c0_i32_0 = arith.constant 0 : i32
    %c0_i32_1 = arith.constant 0 : i32
    return %arg0, %c0_i32, %c0_i32_0 : i32, i32, i32
  }
}

</mosaic_0001>

<llo_original>
// kernel: basic_block_1d.1
$region0: #{basic_block_1d.1}
  #allocation0 [shape = 'u32[]', space=smem, size = 0x4, offset = 0x4, fixed_abs, tag = 'smem constant byte address 0x4 - core index']
  #allocation1 [shape = 'u32[72,128]{1,0:T(1,128)}', space=vmem, size = 0x9000, scoped, tag = 'internal scratch']
  #allocation2 [shape = 'f32[2,8,134]{2,1,0:T(8,128)}', space=vmem, size = 0x4000, scoped, tag = 'scratch operand']
  #allocation3 [shape = 'f32[2,56,128]{2,1,0:T(8,128)}', space=vmem, size = 0xe000, scoped, tag = 'scratch operand']
  %s0 = inlined_call_operand.vmem [shape: f32[2,8,128], index: 0, kind: input, shape index: {}]
  %s1 = inlined_call_operand.vmem [shape: f32[8,56], index: 1, kind: input, shape index: {}]
  %s2 = inlined_call_operand.vmem [shape: f32[8,1], index: 2, kind: input, shape index: {}]
  %s3 = inlined_call_operand.vmem [shape: f32[8,56], index: 3, kind: input, shape index: {}]
  %s4 = inlined_call_operand.vmem [shape: f32[8,1], index: 4, kind: input, shape index: {}]
  %s5 = inlined_call_operand.hbm [shape: f32[2,8,128], index: 5, kind: output, shape index: {}]
  %s6 = sld [smem:[#allocation0]]
  $region30: #{basic_block_1d.1} parent=0
    _
  %s8 = ssub.s32 1, %s6
  %s9 = scalar_select 0, %s8, %s6
  $region1: #{basic_block_1d.1} parent=0
    #allocation4 [shape = 'u8[8192]{0}', space=vmem, size = 0x2000, scoped, tag = 'output window, operand 0, single buffered']
    #allocation5 [shape = 's32[1]{0}', space=sflag, size = 0x4, scoped, tag = 'scoped memory for basic_block_1d.1']
    %10 = vsyncpa [#allocation5], 0
    // Predicated region
    $region2: #{basic_block_1d.1} parent=1 // pred_check
      _
    $region3: #{basic_block_1d.1} parent=1 // pred_check_branch
      %12 = sbr.rel (0) target = $region5
    $region4: #{basic_block_1d.1} parent=1 // pred_region
      _
    $region5: #{basic_block_1d.1} parent=1 // pred_fallthru
      _
    // Predicated region
    $region6: #{basic_block_1d.1} parent=1 // pred_check
      _
    $region7: #{basic_block_1d.1} parent=1 // pred_check_branch
      %14 = sbr.rel (0) target = $region9
    $region8: #{basic_block_1d.1} parent=1 // pred_region
      _
    $region9: #{basic_block_1d.1} parent=1 // pred_fallthru
      _
    // Predicated region
    $region10: #{basic_block_1d.1} parent=1 // pred_check
      _
    $region11: #{basic_block_1d.1} parent=1 // pred_check_branch
      %16 = sbr.rel (0) target = $region13
    $region12: #{basic_block_1d.1} parent=1 // pred_region
      _
    $region13: #{basic_block_1d.1} parent=1 // pred_fallthru
      _
    // Predicated region
    $region14: #{basic_block_1d.1} parent=1 // pred_check
      _
    $region15: #{basic_block_1d.1} parent=1 // pred_check_branch
      %18 = sbr.rel (0) target = $region17
    $region16: #{basic_block_1d.1} parent=1 // pred_region
      _
    $region17: #{basic_block_1d.1} parent=1 // pred_fallthru
      _
    // Predicated region
    $region18: #{basic_block_1d.1} parent=1 // pred_check
      _
    $region19: #{basic_block_1d.1} parent=1 // pred_check_branch
      %20 = sbr.rel (0) target = $region21
    $region20: #{basic_block_1d.1} parent=1 // pred_region
      _
    $region21: #{basic_block_1d.1} parent=1 // pred_fallthru
      _
    %vm21 = vcmask 23552
    %22 = vst.msk [vmem:[#allocation2] sm:$0xff] %vm21, 0.0
    %23 = vst.msk [vmem:[#allocation2 + $0x10] sm:$0xff] %vm21, 0.0
    %vm24 = vcmask 48152
    %25 = vst.msk [vmem:[#allocation2 + $0x8] sm:$0xff] %vm24, 0.0
    %26 = vst.msk [vmem:[#allocation2 + $0x18] sm:$0xff] %vm24, 0.0
    %v27 = vld [vmem:[%s0] sm:$0xff]
    %v28 = vld [vmem:[%s0 + $0x8] sm:$0xff]
    %31 = vrot.lane.b32.xlu0 %v27, 3
    %v32 = vpop.permute.xlu0 %31
    %33 = vrot.lane.b32.xlu0 %v28, 3
    %v34 = vpop.permute.xlu0 %33
    %vm37 = vcmask 1047576
    %38 = vst.msk [vmem:[#allocation2] sm:$0xff] %vm37, %v32
    %39 = vst.msk [vmem:[#allocation2 + $0x8] sm:$0xff] %vm21, %v32
    %40 = vst.msk [vmem:[#allocation2 + $0x10] sm:$0xff] %vm37, %v34
    %41 = vst.msk [vmem:[#allocation2 + $0x18] sm:$0xff] %vm21, %v34
    %v42 = vld [vmem:[#allocation2] sm:$0xff]
    %v43 = vld [vmem:[#allocation2 + $0x10] sm:$0xff]
    %44 = vst [vmem:[#allocation3] sm:$0xff] %v42
    %45 = vst [vmem:[#allocation3 + $0x38] sm:$0xff] %v43
    %v46 = vld [vmem:[#allocation2] sm:$0xff]
    %v47 = vld [vmem:[#allocation2 + $0x8] sm:$0xff]
    %v48 = vld [vmem:[#allocation2 + $0x10] sm:$0xff]
    %v49 = vld [vmem:[#allocation2 + $0x18] sm:$0xff]
    %54 = vrot.lane.b32.xlu0 %v46, 127
    %v55 = vpop.permute.xlu0 %54
    %56 = vrot.lane.b32.xlu0 %v47, 127
    %v57 = vpop.permute.xlu0 %56
    %58 = vrot.lane.b32.xlu0 %v48, 127
    %v59 = vpop.permute.xlu0 %58
    %60 = vrot.lane.b32.xlu0 %v49, 127
    %v61 = vpop.permute.xlu0 %60
    %vm62 = vcmask 1039360
    %v63 = vsel %vm62, %v55, %v57
    %v64 = vsel %vm62, %v59, %v61
    %67 = vst [vmem:[#allocation3 + $0x8] sm:$0xff] %v63
    %68 = vst [vmem:[#allocation3 + $0x40] sm:$0xff] %v64
    %v69 = vld [vmem:[#allocation2] sm:$0xff]
    %v70 = vld [vmem:[#allocation2 + $0x8] sm:$0xff]
    %v71 = vld [vmem:[#allocation2 + $0x10] sm:$0xff]
    %v72 = vld [vmem:[#allocation2 + $0x18] sm:$0xff]
    %77 = vrot.lane.b32.xlu0 %v69, 126
    %v78 = vpop.permute.xlu0 %77
    %79 = vrot.lane.b32.xlu0 %v70, 126
    %v80 = vpop.permute.xlu0 %79
    %81 = vrot.lane.b32.xlu0 %v71, 126
    %v82 = vpop.permute.xlu0 %81
    %83 = vrot.lane.b32.xlu0 %v72, 126
    %v84 = vpop.permute.xlu0 %83
    %vm85 = vcmask 1031168
    %v86 = vsel %vm85, %v78, %v80
    %v87 = vsel %vm85, %v82, %v84
    %90 = vst [vmem:[#allocation3 + $0x10] sm:$0xff] %v86
    %91 = vst [vmem:[#allocation3 + $0x48] sm:$0xff] %v87
    %v92 = vld [vmem:[#allocation2] sm:$0xff]
    %v93 = vld [vmem:[#allocation2 + $0x8] sm:$0xff]
    %v94 = vld [vmem:[#allocation2 + $0x10] sm:$0xff]
    %v95 = vld [vmem:[#allocation2 + $0x18] sm:$0xff]
    %100 = vrot.lane.b32.xlu0 %v92, 125
    %v101 = vpop.permute.xlu0 %100
    %102 = vrot.lane.b32.xlu0 %v93, 125
    %v103 = vpop.permute.xlu0 %102
    %104 = vrot.lane.b32.xlu0 %v94, 125
    %v105 = vpop.permute.xlu0 %104
    %106 = vrot.lane.b32.xlu0 %v95, 125
    %v107 = vpop.permute.xlu0 %106
    %vm108 = vcmask 1022976
    %v109 = vsel %vm108, %v101, %v103
    %v110 = vsel %vm108, %v105, %v107
    %113 = vst [vmem:[#allocation3 + $0x18] sm:$0xff] %v109
    %114 = vst [vmem:[#allocation3 + $0x50] sm:$0xff] %v110
    %v115 = vld [vmem:[#allocation2] sm:$0xff]
    %v116 = vld [vmem:[#allocation2 + $0x8] sm:$0xff]
    %v117 = vld [vmem:[#allocation2 + $0x10] sm:$0xff]
    %v118 = vld [vmem:[#allocation2 + $0x18] sm:$0xff]
    %123 = vrot.lane.b32.xlu0 %v115, 124
    %v124 = vpop.permute.xlu0 %123
    %125 = vrot.lane.b32.xlu0 %v116, 124
    %v126 = vpop.permute.xlu0 %125
    %127 = vrot.lane.b32.xlu0 %v117, 124
    %v128 = vpop.permute.xlu0 %127
    %129 = vrot.lane.b32.xlu0 %v118, 124
    %v130 = vpop.permute.xlu0 %129
    %vm131 = vcmask 1014784
    %v132 = vsel %vm131, %v124, %v126
    %v133 = vsel %vm131, %v128, %v130
    %136 = vst [vmem:[#allocation3 + $0x20] sm:$0xff] %v132
    %137 = vst [vmem:[#allocation3 + $0x58] sm:$0xff] %v133
    %v138 = vld [vmem:[#allocation2] sm:$0xff]
    %v139 = vld [vmem:[#allocation2 + $0x8] sm:$0xff]
    %v140 = vld [vmem:[#allocation2 + $0x10] sm:$0xff]
    %v141 = vld [vmem:[#allocation2 + $0x18] sm:$0xff]
    %146 = vrot.lane.b32.xlu0 %v138, 123
    %v147 = vpop.permute.xlu0 %146
    %148 = vrot.lane.b32.xlu0 %v139, 123
    %v149 = vpop.permute.xlu0 %148
    %150 = vrot.lane.b32.xlu0 %v140, 123
    %v151 = vpop.permute.xlu0 %150
    %152 = vrot.lane.b32.xlu0 %v141, 123
    %v153 = vpop.permute.xlu0 %152
    %vm154 = vcmask 1006592
    %v155 = vsel %vm154, %v147, %v149
    %v156 = vsel %vm154, %v151, %v153
    %159 = vst [vmem:[#allocation3 + $0x28] sm:$0xff] %v155
    %160 = vst [vmem:[#allocation3 + $0x60] sm:$0xff] %v156
    %v161 = vld [vmem:[#allocation2] sm:$0xff]
    %v162 = vld [vmem:[#allocation2 + $0x8] sm:$0xff]
    %v163 = vld [vmem:[#allocation2 + $0x10] sm:$0xff]
    %v164 = vld [vmem:[#allocation2 + $0x18] sm:$0xff]
    %169 = vrot.lane.b32.xlu0 %v161, 122
    %v170 = vpop.permute.xlu0 %169
    %171 = vrot.lane.b32.xlu0 %v162, 122
    %v172 = vpop.permute.xlu0 %171
    %173 = vrot.lane.b32.xlu0 %v163, 122
    %v174 = vpop.permute.xlu0 %173
    %175 = vrot.lane.b32.xlu0 %v164, 122
    %v176 = vpop.permute.xlu0 %175
    %vm177 = vcmask 998400
    %v178 = vsel %vm177, %v170, %v172
    %v179 = vsel %vm177, %v174, %v176
    %182 = vst [vmem:[#allocation3 + $0x30] sm:$0xff] %v178
    %183 = vst [vmem:[#allocation3 + $0x68] sm:$0xff] %v179
    %v184 = vld [vmem:[%s1] sm:$0xff]
    %v185 = vld [vmem:[#allocation3] sm:$0xff]
    %v186 = vld [vmem:[#allocation3 + $0x8] sm:$0xff]
    %v187 = vld [vmem:[#allocation3 + $0x10] sm:$0xff]
    %v188 = vld [vmem:[#allocation3 + $0x18] sm:$0xff]
    %v189 = vld [vmem:[#allocation3 + $0x20] sm:$0xff]
    %v190 = vld [vmem:[#allocation3 + $0x28] sm:$0xff]
    %v191 = vld [vmem:[#allocation3 + $0x30] sm:$0xff]
    %v192 = vld [vmem:[%s2] sm:$0xff]
    %194 = vset.pattern.permute.xlu0 0
    %195 = vperm.xlu0 %194, %v192
    %v196 = vpop.permute.xlu0 %195
    %vm198 = vcmask 457728
    %v200 = vsel %vm198, %v184, 0
    %202 = vmatpush.msra.mxu0 0.0
    %203 = vmatpush.msra.mxu0 0.0
    %204 = vmatpush.msra.mxu0 0.0
    %205 = vmatpush.msra.mxu0 0.0
    %206 = vmatpush.msra.mxu0 0.0
    %207 = vmatpush.msra.mxu0 0.0
    %208 = vmatpush.msra.mxu0 0.0
    %209 = vmatpush.msra.mxu0 0.0
    %210 = vmatpush.msra.mxu0 0.0
    %211 = vmatpush.msra.mxu0 %v191
    %212 = vmatpush.msra.mxu0 %v190
    %213 = vmatpush.msra.mxu0 %v189
    %214 = vmatpush.msra.mxu0 %v188
    %215 = vmatpush.msra.mxu0 %v187
    %216 = vmatpush.msra.mxu0 %v186
    %217 = vmatpush.msra.mxu0 %v185
    %218 = vmatmul.f32.gmra.mxu0 %v200
    %v219 = vpop.f32.mrf.mxu0
    %v220 = vadd.f32 %v196, %v219
    %221 = vdwg.mxu0
    %v222 = vmax.f32 %v220, 0.0
    %224 = vrot.lane.b32.xlu0 %v222, 3
    %v225 = vpop.permute.xlu0 %224
    %227 = vst.msk [vmem:[#allocation2] sm:$0xff] %vm37, %v225
    %228 = vst.msk [vmem:[#allocation2 + $0x8] sm:$0xff] %vm21, %v225
    %v229 = vld [vmem:[%s1] sm:$0xff]
    %s230 = scalar_lea.vmem [#allocation3], 56
    %v231 = vld [vmem:[%s230] sm:$0xff]
    %v232 = vld [vmem:[%s230 + $0x8] sm:$0xff]
    %v233 = vld [vmem:[%s230 + $0x10] sm:$0xff]
    %v234 = vld [vmem:[%s230 + $0x18] sm:$0xff]
    %v235 = vld [vmem:[%s230 + $0x20] sm:$0xff]
    %v236 = vld [vmem:[%s230 + $0x28] sm:$0xff]
    %v237 = vld [vmem:[%s230 + $0x30] sm:$0xff]
    %v238 = vld [vmem:[%s2] sm:$0xff]
    %240 = vset.pattern.permute.xlu0 0
    %241 = vperm.xlu0 %240, %v238
    %v242 = vpop.permute.xlu0 %241
    %v245 = vsel %vm198, %v229, 0
    %247 = vmatpush.msra.mxu0 0.0
    %248 = vmatpush.msra.mxu0 0.0
    %249 = vmatpush.msra.mxu0 0.0
    %250 = vmatpush.msra.mxu0 0.0
    %251 = vmatpush.msra.mxu0 0.0
    %252 = vmatpush.msra.mxu0 0.0
    %253 = vmatpush.msra.mxu0 0.0
    %254 = vmatpush.msra.mxu0 0.0
    %255 = vmatpush.msra.mxu0 0.0
    %256 = vmatpush.msra.mxu0 %v237
    %257 = vmatpush.msra.mxu0 %v236
    %258 = vmatpush.msra.mxu0 %v235
    %259 = vmatpush.msra.mxu0 %v234
    %260 = vmatpush.msra.mxu0 %v233
    %261 = vmatpush.msra.mxu0 %v232
    %262 = vmatpush.msra.mxu0 %v231
    %263 = vmatmul.f32.gmra.mxu0 %v245
    %v264 = vpop.f32.mrf.mxu0
    %v265 = vadd.f32 %v242, %v264
    %266 = vdwg.mxu0
    %v267 = vmax.f32 %v265, 0.0
    %269 = vrot.lane.b32.xlu0 %v267, 3
    %v270 = vpop.permute.xlu0 %269
    %s272 = scalar_lea.vmem [#allocation2], 16
    %273 = vst.msk [vmem:[%s272] sm:$0xff] %vm37, %v270
    %274 = vst.msk [vmem:[%s272 + $0x8] sm:$0xff] %vm21, %v270
    %v275 = vld [vmem:[#allocation2] sm:$0xff]
    %v276 = vld [vmem:[#allocation2 + $0x10] sm:$0xff]
    %277 = vst [vmem:[#allocation3] sm:$0xff] %v275
    %278 = vst [vmem:[#allocation3 + $0x38] sm:$0xff] %v276
    %v279 = vld [vmem:[#allocation2] sm:$0xff]
    %v280 = vld [vmem:[#allocation2 + $0x8] sm:$0xff]
    %v281 = vld [vmem:[#allocation2 + $0x10] sm:$0xff]
    %v282 = vld [vmem:[#allocation2 + $0x18] sm:$0xff]
    %287 = vrot.lane.b32.xlu0 %v279, 127
    %v288 = vpop.permute.xlu0 %287
    %289 = vrot.lane.b32.xlu0 %v280, 127
    %v290 = vpop.permute.xlu0 %289
    %291 = vrot.lane.b32.xlu0 %v281, 127
    %v292 = vpop.permute.xlu0 %291
    %293 = vrot.lane.b32.xlu0 %v282, 127
    %v294 = vpop.permute.xlu0 %293
    %v295 = vsel %vm62, %v288, %v290
    %v296 = vsel %vm62, %v292, %v294
    %299 = vst [vmem:[#allocation3 + $0x8] sm:$0xff] %v295
    %300 = vst [vmem:[#allocation3 + $0x40] sm:$0xff] %v296
    %v301 = vld [vmem:[#allocation2] sm:$0xff]
    %v302 = vld [vmem:[#allocation2 + $0x8] sm:$0xff]
    %v303 = vld [vmem:[#allocation2 + $0x10] sm:$0xff]
    %v304 = vld [vmem:[#allocation2 + $0x18] sm:$0xff]
    %309 = vrot.lane.b32.xlu0 %v301, 126
    %v310 = vpop.permute.xlu0 %309
    %311 = vrot.lane.b32.xlu0 %v302, 126
    %v312 = vpop.permute.xlu0 %311
    %313 = vrot.lane.b32.xlu0 %v303, 126
    %v314 = vpop.permute.xlu0 %313
    %315 = vrot.lane.b32.xlu0 %v304, 126
    %v316 = vpop.permute.xlu0 %315
    %v317 = vsel %vm85, %v310, %v312
    %v318 = vsel %vm85, %v314, %v316
    %321 = vst [vmem:[#allocation3 + $0x10] sm:$0xff] %v317
    %322 = vst [vmem:[#allocation3 + $0x48] sm:$0xff] %v318
    %v323 = vld [vmem:[#allocation2] sm:$0xff]
    %v324 = vld [vmem:[#allocation2 + $0x8] sm:$0xff]
    %v325 = vld [vmem:[#allocation2 + $0x10] sm:$0xff]
    %v326 = vld [vmem:[#allocation2 + $0x18] sm:$0xff]
    %331 = vrot.lane.b32.xlu0 %v323, 125
    %v332 = vpop.permute.xlu0 %331
    %333 = vrot.lane.b32.xlu0 %v324, 125
    %v334 = vpop.permute.xlu0 %333
    %335 = vrot.lane.b32.xlu0 %v325, 125
    %v336 = vpop.permute.xlu0 %335
    %337 = vrot.lane.b32.xlu0 %v326, 125
    %v338 = vpop.permute.xlu0 %337
    %v339 = vsel %vm108, %v332, %v334
    %v340 = vsel %vm108, %v336, %v338
    %343 = vst [vmem:[#allocation3 + $0x18] sm:$0xff] %v339
    %344 = vst [vmem:[#allocation3 + $0x50] sm:$0xff] %v340
    %v345 = vld [vmem:[#allocation2] sm:$0xff]
    %v346 = vld [vmem:[#allocation2 + $0x8] sm:$0xff]
    %v347 = vld [vmem:[#allocation2 + $0x10] sm:$0xff]
    %v348 = vld [vmem:[#allocation2 + $0x18] sm:$0xff]
    %353 = vrot.lane.b32.xlu0 %v345, 124
    %v354 = vpop.permute.xlu0 %353
    %355 = vrot.lane.b32.xlu0 %v346, 124
    %v356 = vpop.permute.xlu0 %355
    %357 = vrot.lane.b32.xlu0 %v347, 124
    %v358 = vpop.permute.xlu0 %357
    %359 = vrot.lane.b32.xlu0 %v348, 124
    %v360 = vpop.permute.xlu0 %359
    %v361 = vsel %vm131, %v354, %v356
    %v362 = vsel %vm131, %v358, %v360
    %365 = vst [vmem:[#allocation3 + $0x20] sm:$0xff] %v361
    %366 = vst [vmem:[#allocation3 + $0x58] sm:$0xff] %v362
    %v367 = vld [vmem:[#allocation2] sm:$0xff]
    %v368 = vld [vmem:[#allocation2 + $0x8] sm:$0xff]
    %v369 = vld [vmem:[#allocation2 + $0x10] sm:$0xff]
    %v370 = vld [vmem:[#allocation2 + $0x18] sm:$0xff]
    %375 = vrot.lane.b32.xlu0 %v367, 123
    %v376 = vpop.permute.xlu0 %375
    %377 = vrot.lane.b32.xlu0 %v368, 123
    %v378 = vpop.permute.xlu0 %377
    %379 = vrot.lane.b32.xlu0 %v369, 123
    %v380 = vpop.permute.xlu0 %379
    %381 = vrot.lane.b32.xlu0 %v370, 123
    %v382 = vpop.permute.xlu0 %381
    %v383 = vsel %vm154, %v376, %v378
    %v384 = vsel %vm154, %v380, %v382
    %387 = vst [vmem:[#allocation3 + $0x28] sm:$0xff] %v383
    %388 = vst [vmem:[#allocation3 + $0x60] sm:$0xff] %v384
    %v389 = vld [vmem:[#allocation2] sm:$0xff]
    %v390 = vld [vmem:[#allocation2 + $0x8] sm:$0xff]
    %v391 = vld [vmem:[#allocation2 + $0x10] sm:$0xff]
    %v392 = vld [vmem:[#allocation2 + $0x18] sm:$0xff]
    %397 = vrot.lane.b32.xlu0 %v389, 122
    %v398 = vpop.permute.xlu0 %397
    %399 = vrot.lane.b32.xlu0 %v390, 122
    %v400 = vpop.permute.xlu0 %399
    %401 = vrot.lane.b32.xlu0 %v391, 122
    %v402 = vpop.permute.xlu0 %401
    %403 = vrot.lane.b32.xlu0 %v392, 122
    %v404 = vpop.permute.xlu0 %403
    %v405 = vsel %vm177, %v398, %v400
    %v406 = vsel %vm177, %v402, %v404
    %409 = vst [vmem:[#allocation3 + $0x30] sm:$0xff] %v405
    %410 = vst [vmem:[#allocation3 + $0x68] sm:$0xff] %v406
    %v411 = vld [vmem:[%s3] sm:$0xff]
    %v412 = vld [vmem:[#allocation3] sm:$0xff]
    %v413 = vld [vmem:[#allocation3 + $0x8] sm:$0xff]
    %v414 = vld [vmem:[#allocation3 + $0x10] sm:$0xff]
    %v415 = vld [vmem:[#allocation3 + $0x18] sm:$0xff]
    %v416 = vld [vmem:[#allocation3 + $0x20] sm:$0xff]
    %v417 = vld [vmem:[#allocation3 + $0x28] sm:$0xff]
    %v418 = vld [vmem:[#allocation3 + $0x30] sm:$0xff]
    %v419 = vld [vmem:[%s4] sm:$0xff]
    %421 = vset.pattern.permute.xlu0 0
    %422 = vperm.xlu0 %421, %v419
    %v423 = vpop.permute.xlu0 %422
    %v426 = vsel %vm198, %v411, 0
    %428 = vmatpush.msra.mxu0 0.0
    %429 = vmatpush.msra.mxu0 0.0
    %430 = vmatpush.msra.mxu0 0.0
    %431 = vmatpush.msra.mxu0 0.0
    %432 = vmatpush.msra.mxu0 0.0
    %433 = vmatpush.msra.mxu0 0.0
    %434 = vmatpush.msra.mxu0 0.0
    %435 = vmatpush.msra.mxu0 0.0
    %436 = vmatpush.msra.mxu0 0.0
    %437 = vmatpush.msra.mxu0 %v418
    %438 = vmatpush.msra.mxu0 %v417
    %439 = vmatpush.msra.mxu0 %v416
    %440 = vmatpush.msra.mxu0 %v415
    %441 = vmatpush.msra.mxu0 %v414
    %442 = vmatpush.msra.mxu0 %v413
    %443 = vmatpush.msra.mxu0 %v412
    %444 = vmatmul.f32.gmra.mxu0 %v426
    %v445 = vpop.f32.mrf.mxu0
    %v446 = vadd.f32 %v423, %v445
    %447 = vdwg.mxu0
    %v448 = vld [vmem:[%s0] sm:$0xff]
    %v449 = vadd.f32 %v446, %v448
    %v450 = vmax.f32 %v449, 0.0
    %451 = vst [vmem:[#allocation4] sm:$0xff] %v450
    %v452 = vld [vmem:[%s3] sm:$0xff]
    %v453 = vld [vmem:[%s230] sm:$0xff]
    %v454 = vld [vmem:[%s230 + $0x8] sm:$0xff]
    %v455 = vld [vmem:[%s230 + $0x10] sm:$0xff]
    %v456 = vld [vmem:[%s230 + $0x18] sm:$0xff]
    %v457 = vld [vmem:[%s230 + $0x20] sm:$0xff]
    %v458 = vld [vmem:[%s230 + $0x28] sm:$0xff]
    %v459 = vld [vmem:[%s230 + $0x30] sm:$0xff]
    %v460 = vld [vmem:[%s4] sm:$0xff]
    %462 = vset.pattern.permute.xlu0 0
    %463 = vperm.xlu0 %462, %v460
    %v464 = vpop.permute.xlu0 %463
    %v467 = vsel %vm198, %v452, 0
    %469 = vmatpush.msra.mxu0 0.0
    %470 = vmatpush.msra.mxu0 0.0
    %471 = vmatpush.msra.mxu0 0.0
    %472 = vmatpush.msra.mxu0 0.0
    %473 = vmatpush.msra.mxu0 0.0
    %474 = vmatpush.msra.mxu0 0.0
    %475 = vmatpush.msra.mxu0 0.0
    %476 = vmatpush.msra.mxu0 0.0
    %477 = vmatpush.msra.mxu0 0.0
    %478 = vmatpush.msra.mxu0 %v459
    %479 = vmatpush.msra.mxu0 %v458
    %480 = vmatpush.msra.mxu0 %v457
    %481 = vmatpush.msra.mxu0 %v456
    %482 = vmatpush.msra.mxu0 %v455
    %483 = vmatpush.msra.mxu0 %v454
    %484 = vmatpush.msra.mxu0 %v453
    %485 = vmatmul.f32.gmra.mxu0 %v467
    %v486 = vpop.f32.mrf.mxu0
    %v487 = vadd.f32 %v464, %v486
    %488 = vdwg.mxu0
    %s489 = scalar_lea.vmem %s0, 8
    %v490 = vld [vmem:[%s489] sm:$0xff]
    %v491 = vadd.f32 %v487, %v490
    %v492 = vmax.f32 %v491, 0.0
    %s493 = scalar_lea.vmem [#allocation4], 8
    %494 = vst [vmem:[%s493] sm:$0xff] %v492
    // Predicated region
    $region22: #{basic_block_1d.1} parent=1 // pred_check
      _
    $region23: #{basic_block_1d.1} parent=1 // pred_check_branch
      %496 = sbr.rel (0) target = $region25
    $region24: #{basic_block_1d.1} parent=1 // pred_region
      %498 = vsyncadd [#allocation5], 0
      %s499 = sshll.u32 [#allocation4], 4
      %s500 = int_to_ptr.vmem [resolvable:$true] %s499
      %s501 = sshll.u32 %s5, 4
      %s502 = int_to_ptr.hbm [resolvable:$true] %s501
      %507 = dma.vmem_to_hbm [thread:$0]  %s500, 256, %s502, [#allocation5], 128, 128, 8
    $region25: #{basic_block_1d.1} parent=1 // pred_fallthru
      _
    // Predicated region
    $region26: #{basic_block_1d.1} parent=1 // pred_check
      _
    $region27: #{basic_block_1d.1} parent=1 // pred_check_branch
      %509 = sbr.rel (0) target = $region29
    $region28: #{basic_block_1d.1} parent=1 // pred_region
      %511 = dma.done [#allocation5], 256
    $region29: #{basic_block_1d.1} parent=1 // pred_fallthru
      _
    %512 = vsyncpa [#allocation5], 1

</llo_original>
